<compile_context>
chip_gen: v6e
topology: v6e:2x2x1
jax: 0.10.0
libtpu: 0.0.40
codegen_flags: <defaults>
</compile_context>

<pallas_src>
import functools

import jax
import jax.numpy as jnp
from jax import lax
from jax.experimental import pallas as pl
from jax.experimental.pallas import tpu as pltpu

# ---------------- config (small, deterministic synthetic model) ----------------
NUM_CLASS = 10
NUM_SEGMENTS = 3
REPRESENTATION = "mv"        # 'mv' -> data_bn(2) and conv1: Conv2d(2, 64, 7x7, s2, p3, no bias)
LAYERS = (1, 1, 1, 1)        # true resnet152 depth is (3, 8, 36, 3)
BASE_WIDTH = 64
EXPANSION = 4
BN_EPS = 1e-5


def _round_up(x, m):
    return (x + m - 1) // m * m


# ---------------- fused tiled MXU matmul (+bias / BN / residual / ReLU) ---------
def _fused_matmul_kernel(*refs, relu, has_residual):
    if has_residual:
        a_ref, b_ref, bias_ref, res_ref, o_ref, acc_ref = refs
    else:
        a_ref, b_ref, bias_ref, o_ref, acc_ref = refs
        res_ref = None
    k = pl.program_id(2)

    @pl.when(k == 0)
    def _init():
        acc_ref[...] = jnp.zeros_like(acc_ref)

    acc_ref[...] += jnp.dot(a_ref[...], b_ref[...],
                            preferred_element_type=jnp.float32)

    @pl.when(k == pl.num_programs(2) - 1)
    def _finalize():
        y = acc_ref[...] + bias_ref[...]
        if res_ref is not None:
            y = y + res_ref[...].astype(jnp.float32)
        if relu:
            y = jnp.maximum(y, 0.0)
        o_ref[...] = y.astype(o_ref.dtype)


def _fused_matmul(a, b, bias, *, residual=None, relu=False,
                  out_dtype=jnp.bfloat16):
    """out = [relu](a @ b + bias [+ residual]); bf16 MXU operands, f32 accum."""
    M, K = a.shape
    _, N = b.shape
    a = a.astype(jnp.bfloat16)
    b = b.astype(jnp.bfloat16)
    bias = bias.astype(jnp.float32).reshape(1, N)

    tm = min(512, _round_up(M, 8))
    tn = min(256, _round_up(N, 128))
    tk = min(512, _round_up(K, 128))
    Mp, Np, Kp = _round_up(M, tm), _round_up(N, tn), _round_up(K, tk)

    a = jnp.pad(a, ((0, Mp - M), (0, Kp - K)))
    b = jnp.pad(b, ((0, Kp - K), (0, Np - N)))
    bias = jnp.pad(bias, ((0, 0), (0, Np - N)))

    in_specs = [pl.BlockSpec((tm, tk), lambda i, j, k: (i, k)),
                pl.BlockSpec((tk, tn), lambda i, j, k: (k, j)),
                pl.BlockSpec((1, tn), lambda i, j, k: (0, j))]
    args = [a, b, bias]
    if residual is not None:
        res = jnp.pad(residual.astype(jnp.bfloat16),
                      ((0, Mp - M), (0, Np - N)))
        in_specs.append(pl.BlockSpec((tm, tn), lambda i, j, k: (i, j)))
        args.append(res)

    out = pl.pallas_call(
        functools.partial(_fused_matmul_kernel, relu=relu,
                          has_residual=residual is not None),
        out_shape=jax.ShapeDtypeStruct((Mp, Np), out_dtype),
        grid=(Mp // tm, Np // tn, Kp // tk),
        in_specs=in_specs,
        out_specs=pl.BlockSpec((tm, tn), lambda i, j, k: (i, j)),
        scratch_shapes=[pltpu.VMEM((tm, tn), jnp.float32)],
        compiler_params=pltpu.CompilerParams(
            dimension_semantics=("parallel", "parallel", "arbitrary")),
    )(*args)
    return out[:M, :N]


# ------------------------------- conv (fused BN/ReLU) ---------------------------
def _conv2d_fused(x, w, bias, *, stride, pad, relu, residual=None,
                  out_dtype=jnp.bfloat16):
    """x: NHWC; w: PyTorch layout (Cout, Cin, KH, KW); bias: (Cout,) from the
    folded BatchNorm.  1x1 convs skip im2col; KxK convs build bf16 patches."""
    N, H, W_, C = x.shape
    Cout, Cin, KH, KW = w.shape
    assert Cin == C
    OH = (H + 2 * pad - KH) // stride + 1
    OW = (W_ + 2 * pad - KW) // stride + 1

    if KH == 1 and KW == 1 and pad == 0:
        xs = x[:, ::stride, ::stride, :] if stride > 1 else x
        a = xs.reshape(N * OH * OW, C)
    else:
        # TODO(synk): stream the KH*KW taps through the K grid axis instead of
        # materializing the im2col tensor in HBM (patches are already bf16 for
        # all layers after conv1, halving the materialization traffic).
        xp = jnp.pad(x, ((0, 0), (pad, pad), (pad, pad), (0, 0)))
        cols = []
        for dh in range(KH):
            for dw in range(KW):
                cols.append(lax.slice(
                    xp, (0, dh, dw, 0),
                    (N, dh + (OH - 1) * stride + 1,
                     dw + (OW - 1) * stride + 1, C),
                    (1, stride, stride, 1)))
        a = jnp.stack(cols, axis=3).reshape(N * OH * OW, KH * KW * C)

    bmat = jnp.transpose(w, (2, 3, 1, 0)).reshape(KH * KW * C, Cout)
    res2 = None if residual is None else residual.reshape(N * OH * OW, Cout)
    out = _fused_matmul(a, bmat, bias, residual=res2, relu=relu,
                        out_dtype=out_dtype)
    return out.reshape(N, OH, OW, Cout)


def _bn_scale_bias(bn):
    scale = bn["gamma"] * lax.rsqrt(bn["var"] + BN_EPS)
    bias = bn["beta"] - bn["mean"] * scale
    return scale, bias


def _fold_bn_into_conv(w, bn):
    scale, bias = _bn_scale_bias(bn)
    return w * scale[:, None, None, None], bias


# --------------------------------- maxpool / GAP --------------------------------
def _maxpool_kernel(*refs):
    o_ref = refs[-1]
    acc = refs[0][...]
    for r in refs[1:-1]:
        acc = jnp.maximum(acc, r[...])
    o_ref[...] = acc


def _maxpool_3x3_s2_p1(x):
    """MaxPool2d(kernel=3, stride=2, padding=1): 9 strided tap views (glue),
    row-tiled running max inside the Pallas kernel."""
    N, H, W, C = x.shape
    k, s, p = 3, 2, 1
    OH = (H + 2 * p - k) // s + 1
    OW = (W + 2 * p - k) // s + 1
    xp = jnp.pad(x, ((0, 0), (p, p), (p, p), (0, 0)),
                 constant_values=-jnp.inf)
    R = N * OH * OW
    taps = []
    for dh in range(k):
        for dw in range(k):
            taps.append(lax.slice(
                xp, (0, dh, dw, 0),
                (N, dh + (OH - 1) * s + 1, dw + (OW - 1) * s + 1, C),
                (1, s, s, 1)).reshape(R, C))

    tr = min(1024, _round_up(R, 8))
    Rp = _round_up(R, tr)
    taps = [jnp.pad(t, ((0, Rp - R), (0, 0))) for t in taps]

    out = pl.pallas_call(
        _maxpool_kernel,
        out_shape=jax.ShapeDtypeStruct((Rp, C), x.dtype),
        grid=(Rp // tr,),
        in_specs=[pl.BlockSpec((tr, C), lambda i: (i, 0))] * (k * k),
        out_specs=pl.BlockSpec((tr, C), lambda i: (i, 0)),
        compiler_params=pltpu.CompilerParams(
            dimension_semantics=("parallel",)),
    )(*taps)
    return out[:R].reshape(N, OH, OW, C)


def _gap_kernel(x_ref, o_ref, *, inv_hw):
    o_ref[...] = jnp.sum(x_ref[...].astype(jnp.float32), axis=1,
                         keepdims=True) * inv_hw


def _global_avg_pool(x):
    N, H, W, C = x.shape
    x3 = x.reshape(N, H * W, C)
    out = pl.pallas_call(
        functools.partial(_gap_kernel, inv_hw=1.0 / (H * W)),
        out_shape=jax.ShapeDtypeStruct((N, 1, C), jnp.float32),
        grid=(N,),
        in_specs=[pl.BlockSpec((1, H * W, C), lambda i: (i, 0, 0))],
        out_specs=pl.BlockSpec((1, 1, C), lambda i: (i, 0, 0)),
        compiler_params=pltpu.CompilerParams(
            dimension_semantics=("parallel",)),
    )(x3)
    return out.reshape(N, C)


# -------------------------------- model pieces ---------------------------------
def _bottleneck(x, p):
    w1, b1 = _fold_bn_into_conv(p["conv1_w"], p["bn1"])
    out = _conv2d_fused(x, w1, b1, stride=1, pad=0, relu=True)

    w2, b2 = _fold_bn_into_conv(p["conv2_w"], p["bn2"])
    out = _conv2d_fused(out, w2, b2, stride=p["stride"], pad=1, relu=True)

    if "ds_conv_w" in p:
        wd, bd = _fold_bn_into_conv(p["ds_conv_w"], p["ds_bn"])
        identity = _conv2d_fused(x, wd, bd, stride=p["stride"], pad=0,
                                 relu=False)
    else:
        identity = x

    # conv3 + bn3 + residual add + ReLU, all in one matmul epilogue.
    w3, b3 = _fold_bn_into_conv(p["conv3_w"], p["bn3"])
    return _conv2d_fused(out, w3, b3, stride=1, pad=0, relu=True,
                         residual=identity)


def model_forward(x, params):
    # Model.forward: input = input.view((-1,) + input.size()[-3:])
    x = x.reshape((-1,) + x.shape[-3:])                     # (B*T, C, H, W)
    x = jnp.transpose(x, (0, 2, 3, 1)).astype(jnp.float32)  # -> NHWC

    # Fold eval-mode data_bn and bn1 into conv1's weights/bias.
    w1 = params["conv1_w"]
    extra_b = jnp.zeros((w1.shape[0],), jnp.float32)
    if REPRESENTATION in ("mv", "residual"):
        s_d, c_d = _bn_scale_bias(params["data_bn"])
        w1 = w1 * s_d[None, :, None, None]
        # TODO(synk): constant data_bn offset folded as a uniform bias; exact
        # here (c_d == 0) but approximate at zero-padded borders if c_d != 0.
        extra_b = jnp.einsum("oikl,i->o", params["conv1_w"], c_d)
    s1, b1 = _bn_scale_bias(params["bn1"])
    w1 = w1 * s1[:, None, None, None]
    b1 = b1 + extra_b * s1

    x = _conv2d_fused(x, w1, b1, stride=2, pad=3, relu=True)   # conv1+bn1+relu
    x = _maxpool_3x3_s2_p1(x)

    for blocks in params["layers"]:
        for blk in blocks:
            x = _bottleneck(x, blk)

    feat = _global_avg_pool(x)                                  # (N, feat_dim)
    logits = _fused_matmul(feat, params["fc_w"].T,
                           params["fc_b"].reshape(1, -1),
                           relu=False, out_dtype=jnp.float32)   # replaced fc
    return logits


# ------------------------------ parameter setup --------------------------------
def _init_bn(c):
    return dict(gamma=jnp.ones((c,), jnp.float32),
                beta=jnp.zeros((c,), jnp.float32),
                mean=jnp.zeros((c,), jnp.float32),
                var=jnp.ones((c,), jnp.float32))


def _init_params(key):
    keys = iter(jax.random.split(key, 512))

    def conv_w(cout, cin, kh, kw):
        return 0.05 * jax.random.normal(next(keys), (cout, cin, kh, kw),
                                        jnp.float32)

    p = {}
    in_ch = 2 if REPRESENTATION == "mv" else 3
    if REPRESENTATION in ("mv", "residual"):
        p["data_bn"] = _init_bn(in_ch)
    p["conv1_w"] = conv_w(BASE_WIDTH, in_ch, 7, 7)   # Conv2d(2,64,7,2,3,bias=False)
    p["bn1"] = _init_bn(BASE_WIDTH)

    inplanes = BASE_WIDTH
    stages = []
    for stage, nblocks in enumerate(LAYERS):
        planes = BASE_WIDTH * (2 ** stage)
        stage_stride = 1 if stage == 0 else 2
        blocks = []
        for b in range(nblocks):
            s = stage_stride if b == 0 else 1
            blk = dict(stride=s,
                       conv1_w=conv_w(planes, inplanes, 1, 1),
                       bn1=_init_bn(planes),
                       conv2_w=conv_w(planes, planes, 3, 3),
                       bn2=_init_bn(planes),
                       conv3_w=conv_w(planes * EXPANSION, planes, 1, 1),
                       bn3=_init_bn(planes * EXPANSION))
            if s != 1 or inplanes != planes * EXPANSION:
                blk["ds_conv_w"] = conv_w(planes * EXPANSION, inplanes, 1, 1)
                blk["ds_bn"] = _init_bn(planes * EXPANSION)
            inplanes = planes * EXPANSION
            blocks.append(blk)
        stages.append(blocks)
    p["layers"] = stages

    feat_dim = BASE_WIDTH * (2 ** 3) * EXPANSION      # 2048
    p["fc_w"] = 0.05 * jax.random.normal(next(keys), (NUM_CLASS, feat_dim),
                                         jnp.float32)
    p["fc_b"] = jnp.zeros((NUM_CLASS,), jnp.float32)
    return p


# ------------------------------------ main --------------------------------------
if __name__ == "__main__":
    key = jax.random.PRNGKey(0)
    kp, kx = jax.random.split(key)
    params = _init_params(kp)

    # input like the TSN dataloader: (batch, num_segments, C, H, W), mv -> C=2
    B, T, C, H, W = 2, NUM_SEGMENTS, 2, 16, 16
    x = jax.random.normal(kx, (B, T, C, H, W), jnp.float32)

    out = model_forward(x, params)
    out = jax.block_until_ready(out)
    assert out.shape == (B * T, NUM_CLASS), out.shape
    assert out.dtype == jnp.float32
    print("KERNEL_OK")
</pallas_src>

<mosaic_0001>
module attributes {stable_mosaic.version = 11 : i64} {
  func.func @_fused_matmul_kernel(%arg0: i32, %arg1: i32, %arg2: i32, %arg3: memref<384x128xbf16, #tpu.memory_space<vmem>>, %arg4: memref<128x128xbf16, #tpu.memory_space<vmem>>, %arg5: memref<1x128xf32, #tpu.memory_space<vmem>>, %arg6: memref<384x128xbf16, #tpu.memory_space<vmem>>, %arg7: memref<384x128xf32, #tpu.memory_space<vmem>>) attributes {dimension_semantics = [#tpu.dimension_semantics<parallel>, #tpu.dimension_semantics<parallel>, #tpu.dimension_semantics<arbitrary>], iteration_bounds = array<i64: 1, 1, 1>, scalar_prefetch = 0 : i64, scratch_operands = 1 : i64, tpu.core_type = #tpu.core_type<tc>, window_params = [{transform_indices = @transform_0, window_bounds = array<i64: 384, 128>}, {transform_indices = @transform_1, window_bounds = array<i64: 128, 128>}, {transform_indices = @transform_2, window_bounds = array<i64: 1, 128>}, {transform_indices = @transform_3, window_bounds = array<i64: 384, 128>}]} {
    %c0_i32 = arith.constant 0 : i32
    %0 = arith.cmpi eq, %arg2, %c0_i32 : i32
    %1 = arith.extui %0 : i1 to i32
    %c0_i32_0 = arith.constant 0 : i32
    %2 = arith.cmpi ne, %1, %c0_i32_0 : i32
    scf.if %2 {
      %cst_10 = arith.constant 0.000000e+00 : f32
      %12 = vector.broadcast %cst_10 : f32 to vector<384x128xf32>
      %c0_11 = arith.constant 0 : index
      %c0_12 = arith.constant 0 : index
      %13 = vector.load %arg7[%c0_11, %c0_12] : memref<384x128xf32, #tpu.memory_space<vmem>>, vector<384x128xf32>
      tpu.vector_store %arg7[%c0_11, %c0_12], %12 {strides = array<i32>} : memref<384x128xf32, #tpu.memory_space<vmem>>, vector<384x128xf32>,
    } else {
    }
    %c0 = arith.constant 0 : index
    %c0_1 = arith.constant 0 : index
    %3 = vector.load %arg7[%c0, %c0_1] : memref<384x128xf32, #tpu.memory_space<vmem>>, vector<384x128xf32>
    %c0_2 = arith.constant 0 : index
    %c0_3 = arith.constant 0 : index
    %4 = vector.load %arg3[%c0_2, %c0_3] : memref<384x128xbf16, #tpu.memory_space<vmem>>, vector<384x128xbf16>
    %c0_4 = arith.constant 0 : index
    %c0_5 = arith.constant 0 : index
    %5 = vector.load %arg4[%c0_4, %c0_5] : memref<128x128xbf16, #tpu.memory_space<vmem>>, vector<128x128xbf16>
    %cst = arith.constant dense<0.000000e+00> : vector<384x128xf32>
    %6 = tpu.matmul %4, %5, %cst {dimension_numbers = #tpu.dot_dimension_numbers<[1], [0], [0], [1], [0, 0, 1, 1], [], []>} : vector<384x128xbf16>, vector<128x128xbf16>, vector<384x128xf32> -> vector<384x128xf32>
    %7 = arith.addf %3, %6 : vector<384x128xf32>
    %c0_6 = arith.constant 0 : index
    %c0_7 = arith.constant 0 : index
    %8 = vector.load %arg7[%c0_6, %c0_7] : memref<384x128xf32, #tpu.memory_space<vmem>>, vector<384x128xf32>
    tpu.vector_store %arg7[%c0_6, %c0_7], %7 {strides = array<i32>} : memref<384x128xf32, #tpu.memory_space<vmem>>, vector<384x128xf32>,
    %c0_i32_8 = arith.constant 0 : i32
    %9 = arith.cmpi eq, %arg2, %c0_i32_8 : i32
    %10 = arith.extui %9 : i1 to i32
    %c0_i32_9 = arith.constant 0 : i32
    %11 = arith.cmpi ne, %10, %c0_i32_9 : i32
    scf.if %11 {
      %c0_10 = arith.constant 0 : index
      %c0_11 = arith.constant 0 : index
      %12 = vector.load %arg7[%c0_10, %c0_11] : memref<384x128xf32, #tpu.memory_space<vmem>>, vector<384x128xf32>
      %c0_12 = arith.constant 0 : index
      %c0_13 = arith.constant 0 : index
      %13 = vector.load %arg5[%c0_12, %c0_13] : memref<1x128xf32, #tpu.memory_space<vmem>>, vector<1x128xf32>
      %14 = vector.broadcast %13 : vector<1x128xf32> to vector<384x128xf32>
      %15 = arith.addf %12, %14 : vector<384x128xf32>
      %cst_14 = arith.constant 0.000000e+00 : f32
      %16 = vector.broadcast %cst_14 : f32 to vector<384x128xf32>
      %17 = arith.maximumf %15, %16 : vector<384x128xf32>
      %18 = arith.truncf %17 : vector<384x128xf32> to vector<384x128xbf16>
      %c0_15 = arith.constant 0 : index
      %c0_16 = arith.constant 0 : index
      %19 = vector.load %arg6[%c0_15, %c0_16] : memref<384x128xbf16, #tpu.memory_space<vmem>>, vector<384x128xbf16>
      tpu.vector_store %arg6[%c0_15, %c0_16], %18 {strides = array<i32>} : memref<384x128xbf16, #tpu.memory_space<vmem>>, vector<384x128xbf16>,
    } else {
    }
    return
  }
  func.func @transform_0(%arg0: i32, %arg1: i32, %arg2: i32) -> (i32, i32) {
    %c0_i32 = arith.constant 0 : i32
    return %arg0, %arg2 : i32, i32
  }
  func.func @transform_1(%arg0: i32, %arg1: i32, %arg2: i32) -> (i32, i32) {
    %c0_i32 = arith.constant 0 : i32
    return %arg2, %arg1 : i32, i32
  }
  func.func @transform_2(%arg0: i32, %arg1: i32, %arg2: i32) -> (i32, i32) {
    %c0_i32 = arith.constant 0 : i32
    %c0_i32_0 = arith.constant 0 : i32
    return %c0_i32, %arg1 : i32, i32
  }
  func.func @transform_3(%arg0: i32, %arg1: i32, %arg2: i32) -> (i32, i32) {
    %c0_i32 = arith.constant 0 : i32
    return %arg0, %arg1 : i32, i32
  }
}

</mosaic_0001>

<llo_original>
// kernel: tpu_custom_call.1
$region0: #{tpu_custom_call.1}
  #allocation0 [shape = 'u32[]', space=smem, size = 0x4, offset = 0x4, fixed_abs, tag = 'smem constant byte address 0x4 - core index']
  #allocation1 [shape = 'u32[144,128]{1,0:T(1,128)}', space=vmem, size = 0x12000, scoped, tag = 'internal scratch']
  #allocation2 [shape = 'f32[384,128]{1,0:T(8,128)}', space=vmem, size = 0x30000, scoped, tag = 'scratch operand']
  %s0 = inlined_call_operand.hbm [shape: bf16[384,128], index: 0, kind: input, shape index: {}]
  %s1 = inlined_call_operand.hbm [shape: bf16[128,128], index: 1, kind: input, shape index: {}]
  %s2 = inlined_call_operand.vmem [shape: f32[1,128], index: 2, kind: input, shape index: {}]
  %s3 = inlined_call_operand.hbm [shape: bf16[384,128], index: 3, kind: output, shape index: {}]
  %s4 = sld [smem:[#allocation0]]
  $region38: #{tpu_custom_call.1} parent=0
    _
  %s6 = ssub.s32 1, %s4
  %s7 = scalar_select 0, %s6, %s4
  $region1: #{tpu_custom_call.1} parent=0
    #allocation3 [shape = 'u8[98304]{0}', space=vmem, size = 0x18000, scoped, tag = 'input window, operand 0, single buffered']
    #allocation4 [shape = 's32[1]{0}', space=sflag, size = 0x4, scoped, tag = 'scoped memory for tpu_custom_call.1']
    #allocation5 [shape = 's32[1]{0}', space=sflag, size = 0x4, scoped, tag = 'scoped memory for tpu_custom_call.1']
    #allocation6 [shape = 'u8[32768]{0}', space=vmem, size = 0x8000, scoped, tag = 'input window, operand 1, single buffered']
    #allocation7 [shape = 's32[1]{0}', space=sflag, size = 0x4, scoped, tag = 'scoped memory for tpu_custom_call.1']
    #allocation8 [shape = 'u8[98304]{0}', space=vmem, size = 0x18000, scoped, tag = 'output window, operand 0, single buffered']
    %8 = vsyncpa [#allocation4], 0
    %9 = vsyncpa [#allocation7], 0
    %10 = vsyncpa [#allocation5], 0
    // Predicated region
    $region2: #{tpu_custom_call.1} parent=1 // pred_check
      _
    $region3: #{tpu_custom_call.1} parent=1 // pred_check_branch
      %12 = sbr.rel (0) target = $region5
    $region4: #{tpu_custom_call.1} parent=1 // pred_region
      %s14 = ssub.s32 3072, 3072
      %15 = vsyncadd [#allocation4], %s14
      %s16 = sshll.u32 [#allocation3], 4
      %s17 = int_to_ptr.vmem [resolvable:$true] %s16
      %22 = dma.hbm_to_vmem [thread:$0]  %s0, 3072, %s17, [#allocation4], 64, 64, 4
    $region5: #{tpu_custom_call.1} parent=1 // pred_fallthru
      _
    // Predicated region
    $region6: #{tpu_custom_call.1} parent=1 // pred_check
      _
    $region7: #{tpu_custom_call.1} parent=1 // pred_check_branch
      %24 = sbr.rel (0) target = $region9
    $region8: #{tpu_custom_call.1} parent=1 // pred_region
      %s26 = ssub.s32 1024, 1024
      %27 = vsyncadd [#allocation7], %s26
      %s28 = sshll.u32 [#allocation6], 4
      %s29 = int_to_ptr.vmem [resolvable:$true] %s28
      %34 = dma.hbm_to_vmem [thread:$0]  %s1, 1024, %s29, [#allocation7], 64, 64, 4
    $region9: #{tpu_custom_call.1} parent=1 // pred_fallthru
      _
    // Predicated region
    $region10: #{tpu_custom_call.1} parent=1 // pred_check
      _
    $region11: #{tpu_custom_call.1} parent=1 // pred_check_branch
      %36 = sbr.rel (0) target = $region13
    $region12: #{tpu_custom_call.1} parent=1 // pred_region
      _
    $region13: #{tpu_custom_call.1} parent=1 // pred_fallthru
      _
    // Predicated region
    $region14: #{tpu_custom_call.1} parent=1 // pred_check
      _
    $region15: #{tpu_custom_call.1} parent=1 // pred_check_branch
      %38 = sbr.rel (0) target = $region17
    $region16: #{tpu_custom_call.1} parent=1 // pred_region
      %39 = dma.done [#allocation4], 3072
    $region17: #{tpu_custom_call.1} parent=1 // pred_fallthru
      _
    // Predicated region
    $region18: #{tpu_custom_call.1} parent=1 // pred_check
      _
    $region19: #{tpu_custom_call.1} parent=1 // pred_check_branch
      %41 = sbr.rel (0) target = $region21
    $region20: #{tpu_custom_call.1} parent=1 // pred_region
      %42 = dma.done [#allocation7], 1024
    $region21: #{tpu_custom_call.1} parent=1 // pred_fallthru
      _
    %p44 = scmp.eq.s32.totalorder 0, 0
    // Predicated region
    $region22: #{tpu_custom_call.1} parent=1 // pred_check
      %p45 = pneg %p44
    $region23: #{tpu_custom_call.1} parent=1 // pred_check_branch
      %47 = sbr.rel (%p45) target = $region25
    $region24: #{tpu_custom_call.1} parent=1 // pred_region
      %48 = vst [vmem:[#allocation2] sm:$0xff] 0.0
      %49 = vst [vmem:[#allocation2 + $0x8] sm:$0xff] 0.0
      %50 = vst [vmem:[#allocation2 + $0x10] sm:$0xff] 0.0
      %51 = vst [vmem:[#allocation2 + $0x18] sm:$0xff] 0.0
      %52 = vst [vmem:[#allocation2 + $0x20] sm:$0xff] 0.0
      %53 = vst [vmem:[#allocation2 + $0x28] sm:$0xff] 0.0
      %54 = vst [vmem:[#allocation2 + $0x30] sm:$0xff] 0.0
      %55 = vst [vmem:[#allocation2 + $0x38] sm:$0xff] 0.0
      %56 = vst [vmem:[#allocation2 + $0x40] sm:$0xff] 0.0
      %57 = vst [vmem:[#allocation2 + $0x48] sm:$0xff] 0.0
      %58 = vst [vmem:[#allocation2 + $0x50] sm:$0xff] 0.0
      %59 = vst [vmem:[#allocation2 + $0x58] sm:$0xff] 0.0
      %60 = vst [vmem:[#allocation2 + $0x60] sm:$0xff] 0.0
      %61 = vst [vmem:[#allocation2 + $0x68] sm:$0xff] 0.0
      %62 = vst [vmem:[#allocation2 + $0x70] sm:$0xff] 0.0
      %63 = vst [vmem:[#allocation2 + $0x78] sm:$0xff] 0.0
      %64 = vst [vmem:[#allocation2 + $0x80] sm:$0xff] 0.0
      %65 = vst [vmem:[#allocation2 + $0x88] sm:$0xff] 0.0
      %66 = vst [vmem:[#allocation2 + $0x90] sm:$0xff] 0.0
      %67 = vst [vmem:[#allocation2 + $0x98] sm:$0xff] 0.0
      %68 = vst [vmem:[#allocation2 + $0xa0] sm:$0xff] 0.0
      %69 = vst [vmem:[#allocation2 + $0xa8] sm:$0xff] 0.0
      %70 = vst [vmem:[#allocation2 + $0xb0] sm:$0xff] 0.0
      %71 = vst [vmem:[#allocation2 + $0xb8] sm:$0xff] 0.0
      %72 = vst [vmem:[#allocation2 + $0xc0] sm:$0xff] 0.0
      %73 = vst [vmem:[#allocation2 + $0xc8] sm:$0xff] 0.0
      %74 = vst [vmem:[#allocation2 + $0xd0] sm:$0xff] 0.0
      %75 = vst [vmem:[#allocation2 + $0xd8] sm:$0xff] 0.0
      %76 = vst [vmem:[#allocation2 + $0xe0] sm:$0xff] 0.0
      %77 = vst [vmem:[#allocation2 + $0xe8] sm:$0xff] 0.0
      %78 = vst [vmem:[#allocation2 + $0xf0] sm:$0xff] 0.0
      %79 = vst [vmem:[#allocation2 + $0xf8] sm:$0xff] 0.0
      %80 = vst [vmem:[#allocation2 + $0x100] sm:$0xff] 0.0
      %81 = vst [vmem:[#allocation2 + $0x108] sm:$0xff] 0.0
      %82 = vst [vmem:[#allocation2 + $0x110] sm:$0xff] 0.0
      %83 = vst [vmem:[#allocation2 + $0x118] sm:$0xff] 0.0
      %84 = vst [vmem:[#allocation2 + $0x120] sm:$0xff] 0.0
      %85 = vst [vmem:[#allocation2 + $0x128] sm:$0xff] 0.0
      %86 = vst [vmem:[#allocation2 + $0x130] sm:$0xff] 0.0
      %87 = vst [vmem:[#allocation2 + $0x138] sm:$0xff] 0.0
      %88 = vst [vmem:[#allocation2 + $0x140] sm:$0xff] 0.0
      %89 = vst [vmem:[#allocation2 + $0x148] sm:$0xff] 0.0
      %90 = vst [vmem:[#allocation2 + $0x150] sm:$0xff] 0.0
      %91 = vst [vmem:[#allocation2 + $0x158] sm:$0xff] 0.0
      %92 = vst [vmem:[#allocation2 + $0x160] sm:$0xff] 0.0
      %93 = vst [vmem:[#allocation2 + $0x168] sm:$0xff] 0.0
      %94 = vst [vmem:[#allocation2 + $0x170] sm:$0xff] 0.0
      %95 = vst [vmem:[#allocation2 + $0x178] sm:$0xff] 0.0
    $region25: #{tpu_custom_call.1} parent=1 // pred_fallthru
      _
    %v96 = vld [vmem:[#allocation2] sm:$0xff]
    %v97 = vld [vmem:[#allocation2 + $0x8] sm:$0xff]
    %v98 = vld [vmem:[#allocation2 + $0x10] sm:$0xff]
    %v99 = vld [vmem:[#allocation2 + $0x18] sm:$0xff]
    %v100 = vld [vmem:[#allocation2 + $0x20] sm:$0xff]
    %v101 = vld [vmem:[#allocation2 + $0x28] sm:$0xff]
    %v102 = vld [vmem:[#allocation2 + $0x30] sm:$0xff]
    %v103 = vld [vmem:[#allocation2 + $0x38] sm:$0xff]
    %v104 = vld [vmem:[#allocation2 + $0x40] sm:$0xff]
    %v105 = vld [vmem:[#allocation2 + $0x48] sm:$0xff]
    %v106 = vld [vmem:[#allocation2 + $0x50] sm:$0xff]
    %v107 = vld [vmem:[#allocation2 + $0x58] sm:$0xff]
    %v108 = vld [vmem:[#allocation2 + $0x60] sm:$0xff]
    %v109 = vld [vmem:[#allocation2 + $0x68] sm:$0xff]
    %v110 = vld [vmem:[#allocation2 + $0x70] sm:$0xff]
    %v111 = vld [vmem:[#allocation2 + $0x78] sm:$0xff]
    %v112 = vld [vmem:[#allocation2 + $0x80] sm:$0xff]
    %v113 = vld [vmem:[#allocation2 + $0x88] sm:$0xff]
    %v114 = vld [vmem:[#allocation2 + $0x90] sm:$0xff]
    %v115 = vld [vmem:[#allocation2 + $0x98] sm:$0xff]
    %v116 = vld [vmem:[#allocation2 + $0xa0] sm:$0xff]
    %v117 = vld [vmem:[#allocation2 + $0xa8] sm:$0xff]
    %v118 = vld [vmem:[#allocation2 + $0xb0] sm:$0xff]
    %v119 = vld [vmem:[#allocation2 + $0xb8] sm:$0xff]
    %v120 = vld [vmem:[#allocation2 + $0xc0] sm:$0xff]
    %v121 = vld [vmem:[#allocation2 + $0xc8] sm:$0xff]
    %v122 = vld [vmem:[#allocation2 + $0xd0] sm:$0xff]
    %v123 = vld [vmem:[#allocation2 + $0xd8] sm:$0xff]
    %v124 = vld [vmem:[#allocation2 + $0xe0] sm:$0xff]
    %v125 = vld [vmem:[#allocation2 + $0xe8] sm:$0xff]
    %v126 = vld [vmem:[#allocation2 + $0xf0] sm:$0xff]
    %v127 = vld [vmem:[#allocation2 + $0xf8] sm:$0xff]
    %v128 = vld [vmem:[#allocation2 + $0x100] sm:$0xff]
    %v129 = vld [vmem:[#allocation2 + $0x108] sm:$0xff]
    %v130 = vld [vmem:[#allocation2 + $0x110] sm:$0xff]
    %v131 = vld [vmem:[#allocation2 + $0x118] sm:$0xff]
    %v132 = vld [vmem:[#allocation2 + $0x120] sm:$0xff]
    %v133 = vld [vmem:[#allocation2 + $0x128] sm:$0xff]
    %v134 = vld [vmem:[#allocation2 + $0x130] sm:$0xff]
    %v135 = vld [vmem:[#allocation2 + $0x138] sm:$0xff]
    %v136 = vld [vmem:[#allocation2 + $0x140] sm:$0xff]
    %v137 = vld [vmem:[#allocation2 + $0x148] sm:$0xff]
    %v138 = vld [vmem:[#allocation2 + $0x150] sm:$0xff]
    %v139 = vld [vmem:[#allocation2 + $0x158] sm:$0xff]
    %v140 = vld [vmem:[#allocation2 + $0x160] sm:$0xff]
    %v141 = vld [vmem:[#allocation2 + $0x168] sm:$0xff]
    %v142 = vld [vmem:[#allocation2 + $0x170] sm:$0xff]
    %v143 = vld [vmem:[#allocation2 + $0x178] sm:$0xff]
    %v144 = vld [vmem:[#allocation3] sm:$0xf]
    %v145 = vld [vmem:[#allocation3 + $0x4] sm:$0xf]
    %v146 = vld [vmem:[#allocation3 + $0x8] sm:$0xf]
    %v147 = vld [vmem:[#allocation3 + $0xc] sm:$0xf]
    %v148 = vld [vmem:[#allocation3 + $0x10] sm:$0xf]
    %v149 = vld [vmem:[#allocation3 + $0x14] sm:$0xf]
    %v150 = vld [vmem:[#allocation3 + $0x18] sm:$0xf]
    %v151 = vld [vmem:[#allocation3 + $0x1c] sm:$0xf]
    %v152 = vld [vmem:[#allocation3 + $0x20] sm:$0xf]
    %v153 = vld [vmem:[#allocation3 + $0x24] sm:$0xf]
    %v154 = vld [vmem:[#allocation3 + $0x28] sm:$0xf]
    %v155 = vld [vmem:[#allocation3 + $0x2c] sm:$0xf]
    %v156 = vld [vmem:[#allocation3 + $0x30] sm:$0xf]
    %v157 = vld [vmem:[#allocation3 + $0x34] sm:$0xf]
    %v158 = vld [vmem:[#allocation3 + $0x38] sm:$0xf]
    %v159 = vld [vmem:[#allocation3 + $0x3c] sm:$0xf]
    %v160 = vld [vmem:[#allocation3 + $0x40] sm:$0xf]
    %v161 = vld [vmem:[#allocation3 + $0x44] sm:$0xf]
    %v162 = vld [vmem:[#allocation3 + $0x48] sm:$0xf]
    %v163 = vld [vmem:[#allocation3 + $0x4c] sm:$0xf]
    %v164 = vld [vmem:[#allocation3 + $0x50] sm:$0xf]
    %v165 = vld [vmem:[#allocation3 + $0x54] sm:$0xf]
    %v166 = vld [vmem:[#allocation3 + $0x58] sm:$0xf]
    %v167 = vld [vmem:[#allocation3 + $0x5c] sm:$0xf]
    %v168 = vld [vmem:[#allocation3 + $0x60] sm:$0xf]
    %v169 = vld [vmem:[#allocation3 + $0x64] sm:$0xf]
    %v170 = vld [vmem:[#allocation3 + $0x68] sm:$0xf]
    %v171 = vld [vmem:[#allocation3 + $0x6c] sm:$0xf]
    %v172 = vld [vmem:[#allocation3 + $0x70] sm:$0xf]
    %v173 = vld [vmem:[#allocation3 + $0x74] sm:$0xf]
    %v174 = vld [vmem:[#allocation3 + $0x78] sm:$0xf]
    %v175 = vld [vmem:[#allocation3 + $0x7c] sm:$0xf]
    %v176 = vld [vmem:[#allocation3 + $0x80] sm:$0xf]
    %v177 = vld [vmem:[#allocation3 + $0x84] sm:$0xf]
    %v178 = vld [vmem:[#allocation3 + $0x88] sm:$0xf]
    %v179 = vld [vmem:[#allocation3 + $0x8c] sm:$0xf]
    %v180 = vld [vmem:[#allocation3 + $0x90] sm:$0xf]
    %v181 = vld [vmem:[#allocation3 + $0x94] sm:$0xf]
    %v182 = vld [vmem:[#allocation3 + $0x98] sm:$0xf]
    %v183 = vld [vmem:[#allocation3 + $0x9c] sm:$0xf]
    %v184 = vld [vmem:[#allocation3 + $0xa0] sm:$0xf]
    %v185 = vld [vmem:[#allocation3 + $0xa4] sm:$0xf]
    %v186 = vld [vmem:[#allocation3 + $0xa8] sm:$0xf]
    %v187 = vld [vmem:[#allocation3 + $0xac] sm:$0xf]
    %v188 = vld [vmem:[#allocation3 + $0xb0] sm:$0xf]
    %v189 = vld [vmem:[#allocation3 + $0xb4] sm:$0xf]
    %v190 = vld [vmem:[#allocation3 + $0xb8] sm:$0xf]
    %v191 = vld [vmem:[#allocation3 + $0xbc] sm:$0xf]
    %v192 = vld [vmem:[#allocation6] sm:$0xf]
    %v193 = vld [vmem:[#allocation6 + $0x4] sm:$0xf]
    %v194 = vld [vmem:[#allocation6 + $0x8] sm:$0xf]
    %v195 = vld [vmem:[#allocation6 + $0xc] sm:$0xf]
    %v196 = vld [vmem:[#allocation6 + $0x10] sm:$0xf]
    %v197 = vld [vmem:[#allocation6 + $0x14] sm:$0xf]
    %v198 = vld [vmem:[#allocation6 + $0x18] sm:$0xf]
    %v199 = vld [vmem:[#allocation6 + $0x1c] sm:$0xf]
    %v200 = vld [vmem:[#allocation6 + $0x20] sm:$0xf]
    %v201 = vld [vmem:[#allocation6 + $0x24] sm:$0xf]
    %v202 = vld [vmem:[#allocation6 + $0x28] sm:$0xf]
    %v203 = vld [vmem:[#allocation6 + $0x2c] sm:$0xf]
    %v204 = vld [vmem:[#allocation6 + $0x30] sm:$0xf]
    %v205 = vld [vmem:[#allocation6 + $0x34] sm:$0xf]
    %v206 = vld [vmem:[#allocation6 + $0x38] sm:$0xf]
    %v207 = vld [vmem:[#allocation6 + $0x3c] sm:$0xf]
    %v256 = vunpack.c.l.b16 %v144
    %v257 = vunpack.c.l.b16 %v145
    %v258 = vunpack.c.l.b16 %v146
    %v259 = vunpack.c.l.b16 %v147
    %v260 = vunpack.c.l.b16 %v148
    %v261 = vunpack.c.l.b16 %v149
    %v262 = vunpack.c.l.b16 %v150
    %v263 = vunpack.c.l.b16 %v151
    %v264 = vunpack.c.l.b16 %v152
    %v265 = vunpack.c.l.b16 %v153
    %v266 = vunpack.c.l.b16 %v154
    %v267 = vunpack.c.l.b16 %v155
    %v268 = vunpack.c.l.b16 %v156
    %v269 = vunpack.c.l.b16 %v157
    %v270 = vunpack.c.l.b16 %v158
    %v271 = vunpack.c.l.b16 %v159
    %v272 = vunpack.c.l.b16 %v160
    %v273 = vunpack.c.l.b16 %v161
    %v274 = vunpack.c.l.b16 %v162
    %v275 = vunpack.c.l.b16 %v163
    %v276 = vunpack.c.l.b16 %v164
    %v277 = vunpack.c.l.b16 %v165
    %v278 = vunpack.c.l.b16 %v166
    %v279 = vunpack.c.l.b16 %v167
    %v280 = vunpack.c.l.b16 %v168
    %v281 = vunpack.c.l.b16 %v169
    %v282 = vunpack.c.l.b16 %v170
    %v283 = vunpack.c.l.b16 %v171
    %v284 = vunpack.c.l.b16 %v172
    %v285 = vunpack.c.l.b16 %v173
    %v286 = vunpack.c.l.b16 %v174
    %v287 = vunpack.c.l.b16 %v175
    %v288 = vunpack.c.l.b16 %v176
    %v289 = vunpack.c.l.b16 %v177
    %v290 = vunpack.c.l.b16 %v178
    %v291 = vunpack.c.l.b16 %v179
    %v292 = vunpack.c.l.b16 %v180
    %v293 = vunpack.c.l.b16 %v181
    %v294 = vunpack.c.l.b16 %v182
    %v295 = vunpack.c.l.b16 %v183
    %v296 = vunpack.c.l.b16 %v184
    %v297 = vunpack.c.l.b16 %v185
    %v298 = vunpack.c.l.b16 %v186
    %v299 = vunpack.c.l.b16 %v187
    %v300 = vunpack.c.l.b16 %v188
    %v301 = vunpack.c.l.b16 %v189
    %v302 = vunpack.c.l.b16 %v190
    %v303 = vunpack.c.l.b16 %v191
    %v304 = vpack.c.b16 %v257, %v256
    %v305 = vpack.c.b16 %v259, %v258
    %v306 = vpack.c.b16 %v261, %v260
    %v307 = vpack.c.b16 %v263, %v262
    %v308 = vpack.c.b16 %v265, %v264
    %v309 = vpack.c.b16 %v267, %v266
    %v310 = vpack.c.b16 %v269, %v268
    %v311 = vpack.c.b16 %v271, %v270
    %v312 = vpack.c.b16 %v273, %v272
    %v313 = vpack.c.b16 %v275, %v274
    %v314 = vpack.c.b16 %v277, %v276
    %v315 = vpack.c.b16 %v279, %v278
    %v316 = vpack.c.b16 %v281, %v280
    %v317 = vpack.c.b16 %v283, %v282
    %v318 = vpack.c.b16 %v285, %v284
    %v319 = vpack.c.b16 %v287, %v286
    %v320 = vpack.c.b16 %v289, %v288
    %v321 = vpack.c.b16 %v291, %v290
    %v322 = vpack.c.b16 %v293, %v292
    %v323 = vpack.c.b16 %v295, %v294
    %v324 = vpack.c.b16 %v297, %v296
    %v325 = vpack.c.b16 %v299, %v298
    %v326 = vpack.c.b16 %v301, %v300
    %v327 = vpack.c.b16 %v303, %v302
    %v368 = vunpack.c.l.b16 %v192
    %v369 = vunpack.c.l.b16 %v193
    %v370 = vunpack.c.l.b16 %v194
    %v371 = vunpack.c.l.b16 %v195
    %v372 = vunpack.c.l.b16 %v196
    %v373 = vunpack.c.l.b16 %v197
    %v374 = vunpack.c.l.b16 %v198
    %v375 = vunpack.c.l.b16 %v199
    %v376 = vunpack.c.l.b16 %v200
    %v377 = vunpack.c.l.b16 %v201
    %v378 = vunpack.c.l.b16 %v202
    %v379 = vunpack.c.l.b16 %v203
    %v380 = vunpack.c.l.b16 %v204
    %v381 = vunpack.c.l.b16 %v205
    %v382 = vunpack.c.l.b16 %v206
    %v383 = vunpack.c.l.b16 %v207
    %v384 = vpack.c.b16 %v369, %v368
    %v385 = vpack.c.b16 %v371, %v370
    %v386 = vpack.c.b16 %v373, %v372
    %v387 = vpack.c.b16 %v375, %v374
    %v388 = vpack.c.b16 %v377, %v376
    %v389 = vpack.c.b16 %v379, %v378
    %v390 = vpack.c.b16 %v381, %v380
    %v391 = vpack.c.b16 %v383, %v382
    %400 = vmatprep.subr.bf16.mxu0 0
    %401 = vmatpush1.bf16.msra.mxu0 %v391
    %402 = vmatprep.subr.bf16.mxu0 0
    %403 = vmatpush1.bf16.msra.mxu0 %v390
    %404 = vmatprep.subr.bf16.mxu0 0
    %405 = vmatpush1.bf16.msra.mxu0 %v389
    %406 = vmatprep.subr.bf16.mxu0 0
    %407 = vmatpush1.bf16.msra.mxu0 %v388
    %408 = vmatprep.subr.bf16.mxu0 0
    %409 = vmatpush1.bf16.msra.mxu0 %v387
    %410 = vmatprep.subr.bf16.mxu0 0
    %411 = vmatpush1.bf16.msra.mxu0 %v386
    %412 = vmatprep.subr.bf16.mxu0 0
    %413 = vmatpush1.bf16.msra.mxu0 %v385
    %414 = vmatprep.subr.bf16.mxu0 0
    %415 = vmatpush1.bf16.msra.mxu0 %v384
    %416 = vmatprep.subr.bf16.mxu0 0
    %417 = vmatpush2.bf16.msra.mxu0 0
    %418 = vmatprep.subr.bf16.mxu0 0
    %419 = vmatpush2.bf16.msra.mxu0 0
    %420 = vmatprep.subr.bf16.mxu0 0
    %421 = vmatpush2.bf16.msra.mxu0 0
    %422 = vmatprep.subr.bf16.mxu0 0
    %423 = vmatpush2.bf16.msra.mxu0 0
    %424 = vmatprep.subr.bf16.mxu0 0
    %425 = vmatpush2.bf16.msra.mxu0 0
    %426 = vmatprep.subr.bf16.mxu0 0
    %427 = vmatpush2.bf16.msra.mxu0 0
    %428 = vmatprep.subr.bf16.mxu0 0
    %429 = vmatpush2.bf16.msra.mxu0 0
    %430 = vmatprep.subr.bf16.mxu0 0
    %431 = vmatpush2.bf16.msra.mxu0 0
    %432 = vmatprep.mubr.bf16.mxu0 0
    %433 = vmatmul.mubr.bf16.gmra.mxu0 %v304
    %v434 = vpop.f32.mrf.mxu0
    %v435 = vadd.f32 0.0, %v434
    %v436 = vpop.f32.mrf.mxu0
    %v437 = vpop.f32.mrf.mxu0
    %v438 = vadd.f32 0.0, %v437
    %v439 = vpop.f32.mrf.mxu0
    %440 = vmatprep.mubr.bf16.mxu0 0
    %441 = vmatmul.mubr.bf16.gmra.mxu0 %v305
    %v442 = vpop.f32.mrf.mxu0
    %v443 = vadd.f32 0.0, %v442
    %v444 = vpop.f32.mrf.mxu0
    %v445 = vpop.f32.mrf.mxu0
    %v446 = vadd.f32 0.0, %v445
    %v447 = vpop.f32.mrf.mxu0
    %448 = vmatprep.mubr.bf16.mxu0 0
    %449 = vmatmul.mubr.bf16.gmra.mxu0 %v306
    %v450 = vpop.f32.mrf.mxu0
    %v451 = vadd.f32 0.0, %v450
    %v452 = vpop.f32.mrf.mxu0
    %v453 = vpop.f32.mrf.mxu0
    %v454 = vadd.f32 0.0, %v453
    %v455 = vpop.f32.mrf.mxu0
    %456 = vmatprep.mubr.bf16.mxu0 0
    %457 = vmatmul.mubr.bf16.gmra.mxu0 %v307
    %v458 = vpop.f32.mrf.mxu0
    %v459 = vadd.f32 0.0, %v458
    %v460 = vpop.f32.mrf.mxu0
    %v461 = vpop.f32.mrf.mxu0
    %v462 = vadd.f32 0.0, %v461
    %v463 = vpop.f32.mrf.mxu0
    %464 = vmatprep.mubr.bf16.mxu0 0
    %465 = vmatmul.mubr.bf16.gmra.mxu0 %v308
    %v466 = vpop.f32.mrf.mxu0
    %v467 = vadd.f32 0.0, %v466
    %v468 = vpop.f32.mrf.mxu0
    %v469 = vpop.f32.mrf.mxu0
    %v470 = vadd.f32 0.0, %v469
    %v471 = vpop.f32.mrf.mxu0
    %472 = vmatprep.mubr.bf16.mxu0 0
    %473 = vmatmul.mubr.bf16.gmra.mxu0 %v309
    %v474 = vpop.f32.mrf.mxu0
    %v475 = vadd.f32 0.0, %v474
    %v476 = vpop.f32.mrf.mxu0
    %v477 = vpop.f32.mrf.mxu0
    %v478 = vadd.f32 0.0, %v477
    %v479 = vpop.f32.mrf.mxu0
    %480 = vmatprep.mubr.bf16.mxu0 0
    %481 = vmatmul.mubr.bf16.gmra.mxu0 %v310
    %v482 = vpop.f32.mrf.mxu0
    %v483 = vadd.f32 0.0, %v482
    %v484 = vpop.f32.mrf.mxu0
    %v485 = vpop.f32.mrf.mxu0
    %v486 = vadd.f32 0.0, %v485
    %v487 = vpop.f32.mrf.mxu0
    %488 = vmatprep.mubr.bf16.mxu0 0
    %489 = vmatmul.mubr.bf16.gmra.mxu0 %v311
    %v490 = vpop.f32.mrf.mxu0
    %v491 = vadd.f32 0.0, %v490
    %v492 = vpop.f32.mrf.mxu0
    %v493 = vpop.f32.mrf.mxu0
    %v494 = vadd.f32 0.0, %v493
    %v495 = vpop.f32.mrf.mxu0
    %496 = vmatprep.mubr.bf16.mxu0 0
    %497 = vmatmul.mubr.bf16.gmra.mxu0 %v312
    %v498 = vpop.f32.mrf.mxu0
    %v499 = vadd.f32 0.0, %v498
    %v500 = vpop.f32.mrf.mxu0
    %v501 = vpop.f32.mrf.mxu0
    %v502 = vadd.f32 0.0, %v501
    %v503 = vpop.f32.mrf.mxu0
    %504 = vmatprep.mubr.bf16.mxu0 0
    %505 = vmatmul.mubr.bf16.gmra.mxu0 %v313
    %v506 = vpop.f32.mrf.mxu0
    %v507 = vadd.f32 0.0, %v506
    %v508 = vpop.f32.mrf.mxu0
    %v509 = vpop.f32.mrf.mxu0
    %v510 = vadd.f32 0.0, %v509
    %v511 = vpop.f32.mrf.mxu0
    %512 = vmatprep.mubr.bf16.mxu0 0
    %513 = vmatmul.mubr.bf16.gmra.mxu0 %v314
    %v514 = vpop.f32.mrf.mxu0
    %v515 = vadd.f32 0.0, %v514
    %v516 = vpop.f32.mrf.mxu0
    %v517 = vpop.f32.mrf.mxu0
    %v518 = vadd.f32 0.0, %v517
    %v519 = vpop.f32.mrf.mxu0
    %520 = vmatprep.mubr.bf16.mxu0 0
    %521 = vmatmul.mubr.bf16.gmra.mxu0 %v315
    %v522 = vpop.f32.mrf.mxu0
    %v523 = vadd.f32 0.0, %v522
    %v524 = vpop.f32.mrf.mxu0
    %v525 = vpop.f32.mrf.mxu0
    %v526 = vadd.f32 0.0, %v525
    %v527 = vpop.f32.mrf.mxu0
    %528 = vmatprep.mubr.bf16.mxu0 0
    %529 = vmatmul.mubr.bf16.gmra.mxu0 %v316
    %v530 = vpop.f32.mrf.mxu0
    %v531 = vadd.f32 0.0, %v530
    %v532 = vpop.f32.mrf.mxu0
    %v533 = vpop.f32.mrf.mxu0
    %v534 = vadd.f32 0.0, %v533
    %v535 = vpop.f32.mrf.mxu0
    %536 = vmatprep.mubr.bf16.mxu0 0
    %537 = vmatmul.mubr.bf16.gmra.mxu0 %v317
    %v538 = vpop.f32.mrf.mxu0
    %v539 = vadd.f32 0.0, %v538
    %v540 = vpop.f32.mrf.mxu0
    %v541 = vpop.f32.mrf.mxu0
    %v542 = vadd.f32 0.0, %v541
    %v543 = vpop.f32.mrf.mxu0
    %544 = vmatprep.mubr.bf16.mxu0 0
    %545 = vmatmul.mubr.bf16.gmra.mxu0 %v318
    %v546 = vpop.f32.mrf.mxu0
    %v547 = vadd.f32 0.0, %v546
    %v548 = vpop.f32.mrf.mxu0
    %v549 = vpop.f32.mrf.mxu0
    %v550 = vadd.f32 0.0, %v549
    %v551 = vpop.f32.mrf.mxu0
    %552 = vmatprep.mubr.bf16.mxu0 0
    %553 = vmatmul.mubr.bf16.gmra.mxu0 %v319
    %v554 = vpop.f32.mrf.mxu0
    %v555 = vadd.f32 0.0, %v554
    %v556 = vpop.f32.mrf.mxu0
    %v557 = vpop.f32.mrf.mxu0
    %v558 = vadd.f32 0.0, %v557
    %v559 = vpop.f32.mrf.mxu0
    %560 = vmatprep.mubr.bf16.mxu0 0
    %561 = vmatmul.mubr.bf16.gmra.mxu0 %v320
    %v562 = vpop.f32.mrf.mxu0
    %v563 = vadd.f32 0.0, %v562
    %v564 = vpop.f32.mrf.mxu0
    %v565 = vpop.f32.mrf.mxu0
    %v566 = vadd.f32 0.0, %v565
    %v567 = vpop.f32.mrf.mxu0
    %568 = vmatprep.mubr.bf16.mxu0 0
    %569 = vmatmul.mubr.bf16.gmra.mxu0 %v321
    %v570 = vpop.f32.mrf.mxu0
    %v571 = vadd.f32 0.0, %v570
    %v572 = vpop.f32.mrf.mxu0
    %v573 = vpop.f32.mrf.mxu0
    %v574 = vadd.f32 0.0, %v573
    %v575 = vpop.f32.mrf.mxu0
    %576 = vmatprep.mubr.bf16.mxu0 0
    %577 = vmatmul.mubr.bf16.gmra.mxu0 %v322
    %v578 = vpop.f32.mrf.mxu0
    %v579 = vadd.f32 0.0, %v578
    %v580 = vpop.f32.mrf.mxu0
    %v581 = vpop.f32.mrf.mxu0
    %v582 = vadd.f32 0.0, %v581
    %v583 = vpop.f32.mrf.mxu0
    %584 = vmatprep.mubr.bf16.mxu0 0
    %585 = vmatmul.mubr.bf16.gmra.mxu0 %v323
    %v586 = vpop.f32.mrf.mxu0
    %v587 = vadd.f32 0.0, %v586
    %v588 = vpop.f32.mrf.mxu0
    %v589 = vpop.f32.mrf.mxu0
    %v590 = vadd.f32 0.0, %v589
    %v591 = vpop.f32.mrf.mxu0
    %592 = vmatprep.mubr.bf16.mxu0 0
    %593 = vmatmul.mubr.bf16.gmra.mxu0 %v324
    %v594 = vpop.f32.mrf.mxu0
    %v595 = vadd.f32 0.0, %v594
    %v596 = vpop.f32.mrf.mxu0
    %v597 = vpop.f32.mrf.mxu0
    %v598 = vadd.f32 0.0, %v597
    %v599 = vpop.f32.mrf.mxu0
    %600 = vmatprep.mubr.bf16.mxu0 0
    %601 = vmatmul.mubr.bf16.gmra.mxu0 %v325
    %v602 = vpop.f32.mrf.mxu0
    %v603 = vadd.f32 0.0, %v602
    %v604 = vpop.f32.mrf.mxu0
    %v605 = vpop.f32.mrf.mxu0
    %v606 = vadd.f32 0.0, %v605
    %v607 = vpop.f32.mrf.mxu0
    %608 = vmatprep.mubr.bf16.mxu0 0
    %609 = vmatmul.mubr.bf16.gmra.mxu0 %v326
    %v610 = vpop.f32.mrf.mxu0
    %v611 = vadd.f32 0.0, %v610
    %v612 = vpop.f32.mrf.mxu0
    %v613 = vpop.f32.mrf.mxu0
    %v614 = vadd.f32 0.0, %v613
    %v615 = vpop.f32.mrf.mxu0
    %616 = vmatprep.mubr.bf16.mxu0 0
    %617 = vmatmul.mubr.bf16.gmra.mxu0 %v327
    %v618 = vpop.f32.mrf.mxu0
    %v619 = vadd.f32 0.0, %v618
    %v620 = vpop.f32.mrf.mxu0
    %v621 = vpop.f32.mrf.mxu0
    %v622 = vadd.f32 0.0, %v621
    %v623 = vpop.f32.mrf.mxu0
    %624 = vdwg.mxu0
    %v625 = vadd.f32 %v96, %v435
    %v626 = vadd.f32 %v97, %v438
    %v627 = vadd.f32 %v98, %v443
    %v628 = vadd.f32 %v99, %v446
    %v629 = vadd.f32 %v100, %v451
    %v630 = vadd.f32 %v101, %v454
    %v631 = vadd.f32 %v102, %v459
    %v632 = vadd.f32 %v103, %v462
    %v633 = vadd.f32 %v104, %v467
    %v634 = vadd.f32 %v105, %v470
    %v635 = vadd.f32 %v106, %v475
    %v636 = vadd.f32 %v107, %v478
    %v637 = vadd.f32 %v108, %v483
    %v638 = vadd.f32 %v109, %v486
    %v639 = vadd.f32 %v110, %v491
    %v640 = vadd.f32 %v111, %v494
    %v641 = vadd.f32 %v112, %v499
    %v642 = vadd.f32 %v113, %v502
    %v643 = vadd.f32 %v114, %v507
    %v644 = vadd.f32 %v115, %v510
    %v645 = vadd.f32 %v116, %v515
    %v646 = vadd.f32 %v117, %v518
    %v647 = vadd.f32 %v118, %v523
    %v648 = vadd.f32 %v119, %v526
    %v649 = vadd.f32 %v120, %v531
    %v650 = vadd.f32 %v121, %v534
    %v651 = vadd.f32 %v122, %v539
    %v652 = vadd.f32 %v123, %v542
    %v653 = vadd.f32 %v124, %v547
    %v654 = vadd.f32 %v125, %v550
    %v655 = vadd.f32 %v126, %v555
    %v656 = vadd.f32 %v127, %v558
    %v657 = vadd.f32 %v128, %v563
    %v658 = vadd.f32 %v129, %v566
    %v659 = vadd.f32 %v130, %v571
    %v660 = vadd.f32 %v131, %v574
    %v661 = vadd.f32 %v132, %v579
    %v662 = vadd.f32 %v133, %v582
    %v663 = vadd.f32 %v134, %v587
    %v664 = vadd.f32 %v135, %v590
    %v665 = vadd.f32 %v136, %v595
    %v666 = vadd.f32 %v137, %v598
    %v667 = vadd.f32 %v138, %v603
    %v668 = vadd.f32 %v139, %v606
    %v669 = vadd.f32 %v140, %v611
    %v670 = vadd.f32 %v141, %v614
    %v671 = vadd.f32 %v142, %v619
    %v672 = vadd.f32 %v143, %v622
    %673 = vst [vmem:[#allocation2] sm:$0xff] %v625
    %674 = vst [vmem:[#allocation2 + $0x8] sm:$0xff] %v626
    %675 = vst [vmem:[#allocation2 + $0x10] sm:$0xff] %v627
    %676 = vst [vmem:[#allocation2 + $0x18] sm:$0xff] %v628
    %677 = vst [vmem:[#allocation2 + $0x20] sm:$0xff] %v629
    %678 = vst [vmem:[#allocation2 + $0x28] sm:$0xff] %v630
    %679 = vst [vmem:[#allocation2 + $0x30] sm:$0xff] %v631
    %680 = vst [vmem:[#allocation2 + $0x38] sm:$0xff] %v632
    %681 = vst [vmem:[#allocation2 + $0x40] sm:$0xff] %v633
    %682 = vst [vmem:[#allocation2 + $0x48] sm:$0xff] %v634
    %683 = vst [vmem:[#allocation2 + $0x50] sm:$0xff] %v635
    %684 = vst [vmem:[#allocation2 + $0x58] sm:$0xff] %v636
    %685 = vst [vmem:[#allocation2 + $0x60] sm:$0xff] %v637
    %686 = vst [vmem:[#allocation2 + $0x68] sm:$0xff] %v638
    %687 = vst [vmem:[#allocation2 + $0x70] sm:$0xff] %v639
    %688 = vst [vmem:[#allocation2 + $0x78] sm:$0xff] %v640
    %689 = vst [vmem:[#allocation2 + $0x80] sm:$0xff] %v641
    %690 = vst [vmem:[#allocation2 + $0x88] sm:$0xff] %v642
    %691 = vst [vmem:[#allocation2 + $0x90] sm:$0xff] %v643
    %692 = vst [vmem:[#allocation2 + $0x98] sm:$0xff] %v644
    %693 = vst [vmem:[#allocation2 + $0xa0] sm:$0xff] %v645
    %694 = vst [vmem:[#allocation2 + $0xa8] sm:$0xff] %v646
    %695 = vst [vmem:[#allocation2 + $0xb0] sm:$0xff] %v647
    %696 = vst [vmem:[#allocation2 + $0xb8] sm:$0xff] %v648
    %697 = vst [vmem:[#allocation2 + $0xc0] sm:$0xff] %v649
    %698 = vst [vmem:[#allocation2 + $0xc8] sm:$0xff] %v650
    %699 = vst [vmem:[#allocation2 + $0xd0] sm:$0xff] %v651
    %700 = vst [vmem:[#allocation2 + $0xd8] sm:$0xff] %v652
    %701 = vst [vmem:[#allocation2 + $0xe0] sm:$0xff] %v653
    %702 = vst [vmem:[#allocation2 + $0xe8] sm:$0xff] %v654
    %703 = vst [vmem:[#allocation2 + $0xf0] sm:$0xff] %v655
    %704 = vst [vmem:[#allocation2 + $0xf8] sm:$0xff] %v656
    %705 = vst [vmem:[#allocation2 + $0x100] sm:$0xff] %v657
    %706 = vst [vmem:[#allocation2 + $0x108] sm:$0xff] %v658
    %707 = vst [vmem:[#allocation2 + $0x110] sm:$0xff] %v659
    %708 = vst [vmem:[#allocation2 + $0x118] sm:$0xff] %v660
    %709 = vst [vmem:[#allocation2 + $0x120] sm:$0xff] %v661
    %710 = vst [vmem:[#allocation2 + $0x128] sm:$0xff] %v662
    %711 = vst [vmem:[#allocation2 + $0x130] sm:$0xff] %v663
    %712 = vst [vmem:[#allocation2 + $0x138] sm:$0xff] %v664
    %713 = vst [vmem:[#allocation2 + $0x140] sm:$0xff] %v665
    %714 = vst [vmem:[#allocation2 + $0x148] sm:$0xff] %v666
    %715 = vst [vmem:[#allocation2 + $0x150] sm:$0xff] %v667
    %716 = vst [vmem:[#allocation2 + $0x158] sm:$0xff] %v668
    %717 = vst [vmem:[#allocation2 + $0x160] sm:$0xff] %v669
    %718 = vst [vmem:[#allocation2 + $0x168] sm:$0xff] %v670
    %719 = vst [vmem:[#allocation2 + $0x170] sm:$0xff] %v671
    %720 = vst [vmem:[#allocation2 + $0x178] sm:$0xff] %v672
    // Predicated region
    $region26: #{tpu_custom_call.1} parent=1 // pred_check
      %p721 = pneg %p44
    $region27: #{tpu_custom_call.1} parent=1 // pred_check_branch
      %723 = sbr.rel (%p721) target = $region29
    $region28: #{tpu_custom_call.1} parent=1 // pred_region
      %v724 = vld [vmem:[#allocation2] sm:$0xff]
      %v725 = vld [vmem:[#allocation2 + $0x8] sm:$0xff]
      %v726 = vld [vmem:[#allocation2 + $0x10] sm:$0xff]
      %v727 = vld [vmem:[#allocation2 + $0x18] sm:$0xff]
      %v728 = vld [vmem:[#allocation2 + $0x20] sm:$0xff]
      %v729 = vld [vmem:[#allocation2 + $0x28] sm:$0xff]
      %v730 = vld [vmem:[#allocation2 + $0x30] sm:$0xff]
      %v731 = vld [vmem:[#allocation2 + $0x38] sm:$0xff]
      %v732 = vld [vmem:[#allocation2 + $0x40] sm:$0xff]
      %v733 = vld [vmem:[#allocation2 + $0x48] sm:$0xff]
      %v734 = vld [vmem:[#allocation2 + $0x50] sm:$0xff]
      %v735 = vld [vmem:[#allocation2 + $0x58] sm:$0xff]
      %v736 = vld [vmem:[#allocation2 + $0x60] sm:$0xff]
      %v737 = vld [vmem:[#allocation2 + $0x68] sm:$0xff]
      %v738 = vld [vmem:[#allocation2 + $0x70] sm:$0xff]
      %v739 = vld [vmem:[#allocation2 + $0x78] sm:$0xff]
      %v740 = vld [vmem:[#allocation2 + $0x80] sm:$0xff]
      %v741 = vld [vmem:[#allocation2 + $0x88] sm:$0xff]
      %v742 = vld [vmem:[#allocation2 + $0x90] sm:$0xff]
      %v743 = vld [vmem:[#allocation2 + $0x98] sm:$0xff]
      %v744 = vld [vmem:[#allocation2 + $0xa0] sm:$0xff]
      %v745 = vld [vmem:[#allocation2 + $0xa8] sm:$0xff]
      %v746 = vld [vmem:[#allocation2 + $0xb0] sm:$0xff]
      %v747 = vld [vmem:[#allocation2 + $0xb8] sm:$0xff]
      %v748 = vld [vmem:[#allocation2 + $0xc0] sm:$0xff]
      %v749 = vld [vmem:[#allocation2 + $0xc8] sm:$0xff]
      %v750 = vld [vmem:[#allocation2 + $0xd0] sm:$0xff]
      %v751 = vld [vmem:[#allocation2 + $0xd8] sm:$0xff]
      %v752 = vld [vmem:[#allocation2 + $0xe0] sm:$0xff]
      %v753 = vld [vmem:[#allocation2 + $0xe8] sm:$0xff]
      %v754 = vld [vmem:[#allocation2 + $0xf0] sm:$0xff]
      %v755 = vld [vmem:[#allocation2 + $0xf8] sm:$0xff]
      %v756 = vld [vmem:[#allocation2 + $0x100] sm:$0xff]
      %v757 = vld [vmem:[#allocation2 + $0x108] sm:$0xff]
      %v758 = vld [vmem:[#allocation2 + $0x110] sm:$0xff]
      %v759 = vld [vmem:[#allocation2 + $0x118] sm:$0xff]
      %v760 = vld [vmem:[#allocation2 + $0x120] sm:$0xff]
      %v761 = vld [vmem:[#allocation2 + $0x128] sm:$0xff]
      %v762 = vld [vmem:[#allocation2 + $0x130] sm:$0xff]
      %v763 = vld [vmem:[#allocation2 + $0x138] sm:$0xff]
      %v764 = vld [vmem:[#allocation2 + $0x140] sm:$0xff]
      %v765 = vld [vmem:[#allocation2 + $0x148] sm:$0xff]
      %v766 = vld [vmem:[#allocation2 + $0x150] sm:$0xff]
      %v767 = vld [vmem:[#allocation2 + $0x158] sm:$0xff]
      %v768 = vld [vmem:[#allocation2 + $0x160] sm:$0xff]
      %v769 = vld [vmem:[#allocation2 + $0x168] sm:$0xff]
      %v770 = vld [vmem:[#allocation2 + $0x170] sm:$0xff]
      %v771 = vld [vmem:[#allocation2 + $0x178] sm:$0xff]
      %v772 = vld [vmem:[%s2] sm:$0x1]
      %v774 = vlaneseq
      %v775 = vshrl.u32 %v774, 7
      %v776 = vsub.s32 0, %v775
      %v777 = vrot.slane %v772, %v776
      %v779 = vadd.f32 %v724, %v777
      %v780 = vadd.f32 %v725, %v777
      %v781 = vadd.f32 %v726, %v777
      %v782 = vadd.f32 %v727, %v777
      %v783 = vadd.f32 %v728, %v777
      %v784 = vadd.f32 %v729, %v777
      %v785 = vadd.f32 %v730, %v777
      %v786 = vadd.f32 %v731, %v777
      %v787 = vadd.f32 %v732, %v777
      %v788 = vadd.f32 %v733, %v777
      %v789 = vadd.f32 %v734, %v777
      %v790 = vadd.f32 %v735, %v777
      %v791 = vadd.f32 %v736, %v777
      %v792 = vadd.f32 %v737, %v777
      %v793 = vadd.f32 %v738, %v777
      %v794 = vadd.f32 %v739, %v777
      %v795 = vadd.f32 %v740, %v777
      %v796 = vadd.f32 %v741, %v777
      %v797 = vadd.f32 %v742, %v777
      %v798 = vadd.f32 %v743, %v777
      %v799 = vadd.f32 %v744, %v777
      %v800 = vadd.f32 %v745, %v777
      %v801 = vadd.f32 %v746, %v777
      %v802 = vadd.f32 %v747, %v777
      %v803 = vadd.f32 %v748, %v777
      %v804 = vadd.f32 %v749, %v777
      %v805 = vadd.f32 %v750, %v777
      %v806 = vadd.f32 %v751, %v777
      %v807 = vadd.f32 %v752, %v777
      %v808 = vadd.f32 %v753, %v777
      %v809 = vadd.f32 %v754, %v777
      %v810 = vadd.f32 %v755, %v777
      %v811 = vadd.f32 %v756, %v777
      %v812 = vadd.f32 %v757, %v777
      %v813 = vadd.f32 %v758, %v777
      %v814 = vadd.f32 %v759, %v777
      %v815 = vadd.f32 %v760, %v777
      %v816 = vadd.f32 %v761, %v777
      %v817 = vadd.f32 %v762, %v777
      %v818 = vadd.f32 %v763, %v777
      %v819 = vadd.f32 %v764, %v777
      %v820 = vadd.f32 %v765, %v777
      %v821 = vadd.f32 %v766, %v777
      %v822 = vadd.f32 %v767, %v777
      %v823 = vadd.f32 %v768, %v777
      %v824 = vadd.f32 %v769, %v777
      %v825 = vadd.f32 %v770, %v777
      %v826 = vadd.f32 %v771, %v777
      %v827 = vmax.f32 %v779, 0.0
      %v828 = vmax.f32 %v780, 0.0
      %v829 = vmax.f32 %v781, 0.0
      %v830 = vmax.f32 %v782, 0.0
      %v831 = vmax.f32 %v783, 0.0
      %v832 = vmax.f32 %v784, 0.0
      %v833 = vmax.f32 %v785, 0.0
      %v834 = vmax.f32 %v786, 0.0
      %v835 = vmax.f32 %v787, 0.0
      %v836 = vmax.f32 %v788, 0.0
      %v837 = vmax.f32 %v789, 0.0
      %v838 = vmax.f32 %v790, 0.0
      %v839 = vmax.f32 %v791, 0.0
      %v840 = vmax.f32 %v792, 0.0
      %v841 = vmax.f32 %v793, 0.0
      %v842 = vmax.f32 %v794, 0.0
      %v843 = vmax.f32 %v795, 0.0
      %v844 = vmax.f32 %v796, 0.0
      %v845 = vmax.f32 %v797, 0.0
      %v846 = vmax.f32 %v798, 0.0
      %v847 = vmax.f32 %v799, 0.0
      %v848 = vmax.f32 %v800, 0.0
      %v849 = vmax.f32 %v801, 0.0
      %v850 = vmax.f32 %v802, 0.0
      %v851 = vmax.f32 %v803, 0.0
      %v852 = vmax.f32 %v804, 0.0
      %v853 = vmax.f32 %v805, 0.0
      %v854 = vmax.f32 %v806, 0.0
      %v855 = vmax.f32 %v807, 0.0
      %v856 = vmax.f32 %v808, 0.0
      %v857 = vmax.f32 %v809, 0.0
      %v858 = vmax.f32 %v810, 0.0
      %v859 = vmax.f32 %v811, 0.0
      %v860 = vmax.f32 %v812, 0.0
      %v861 = vmax.f32 %v813, 0.0
      %v862 = vmax.f32 %v814, 0.0
      %v863 = vmax.f32 %v815, 0.0
      %v864 = vmax.f32 %v816, 0.0
      %v865 = vmax.f32 %v817, 0.0
      %v866 = vmax.f32 %v818, 0.0
      %v867 = vmax.f32 %v819, 0.0
      %v868 = vmax.f32 %v820, 0.0
      %v869 = vmax.f32 %v821, 0.0
      %v870 = vmax.f32 %v822, 0.0
      %v871 = vmax.f32 %v823, 0.0
      %v872 = vmax.f32 %v824, 0.0
      %v873 = vmax.f32 %v825, 0.0
      %v874 = vmax.f32 %v826, 0.0
      %v875 = vpack.c.bf16 %v828, %v827
      %v876 = vpack.c.bf16 %v830, %v829
      %v877 = vpack.c.bf16 %v832, %v831
      %v878 = vpack.c.bf16 %v834, %v833
      %v879 = vpack.c.bf16 %v836, %v835
      %v880 = vpack.c.bf16 %v838, %v837
      %v881 = vpack.c.bf16 %v840, %v839
      %v882 = vpack.c.bf16 %v842, %v841
      %v883 = vpack.c.bf16 %v844, %v843
      %v884 = vpack.c.bf16 %v846, %v845
      %v885 = vpack.c.bf16 %v848, %v847
      %v886 = vpack.c.bf16 %v850, %v849
      %v887 = vpack.c.bf16 %v852, %v851
      %v888 = vpack.c.bf16 %v854, %v853
      %v889 = vpack.c.bf16 %v856, %v855
      %v890 = vpack.c.bf16 %v858, %v857
      %v891 = vpack.c.bf16 %v860, %v859
      %v892 = vpack.c.bf16 %v862, %v861
      %v893 = vpack.c.bf16 %v864, %v863
      %v894 = vpack.c.bf16 %v866, %v865
      %v895 = vpack.c.bf16 %v868, %v867
      %v896 = vpack.c.bf16 %v870, %v869
      %v897 = vpack.c.bf16 %v872, %v871
      %v898 = vpack.c.bf16 %v874, %v873
      %v923 = vunpack.c.l.b16 %v875
      %v924 = vunpack.c.h.b16 %v875
      %v925 = vunpack.c.l.b16 %v876
      %v926 = vunpack.c.h.b16 %v876
      %v927 = vunpack.c.l.b16 %v877
      %v928 = vunpack.c.h.b16 %v877
      %v929 = vunpack.c.l.b16 %v878
      %v930 = vunpack.c.h.b16 %v878
      %v931 = vunpack.c.l.b16 %v879
      %v932 = vunpack.c.h.b16 %v879
      %v933 = vunpack.c.l.b16 %v880
      %v934 = vunpack.c.h.b16 %v880
      %v935 = vunpack.c.l.b16 %v881
      %v936 = vunpack.c.h.b16 %v881
      %v937 = vunpack.c.l.b16 %v882
      %v938 = vunpack.c.h.b16 %v882
      %v939 = vunpack.c.l.b16 %v883
      %v940 = vunpack.c.h.b16 %v883
      %v941 = vunpack.c.l.b16 %v884
      %v942 = vunpack.c.h.b16 %v884
      %v943 = vunpack.c.l.b16 %v885
      %v944 = vunpack.c.h.b16 %v885
      %v945 = vunpack.c.l.b16 %v886
      %v946 = vunpack.c.h.b16 %v886
      %v947 = vunpack.c.l.b16 %v887
      %v948 = vunpack.c.h.b16 %v887
      %v949 = vunpack.c.l.b16 %v888
      %v950 = vunpack.c.h.b16 %v888
      %v951 = vunpack.c.l.b16 %v889
      %v952 = vunpack.c.h.b16 %v889
      %v953 = vunpack.c.l.b16 %v890
      %v954 = vunpack.c.h.b16 %v890
      %v955 = vunpack.c.l.b16 %v891
      %v956 = vunpack.c.h.b16 %v891
      %v957 = vunpack.c.l.b16 %v892
      %v958 = vunpack.c.h.b16 %v892
      %v959 = vunpack.c.l.b16 %v893
      %v960 = vunpack.c.h.b16 %v893
      %v961 = vunpack.c.l.b16 %v894
      %v962 = vunpack.c.h.b16 %v894
      %v963 = vunpack.c.l.b16 %v895
      %v964 = vunpack.c.h.b16 %v895
      %v965 = vunpack.c.l.b16 %v896
      %v966 = vunpack.c.h.b16 %v896
      %v967 = vunpack.c.l.b16 %v897
      %v968 = vunpack.c.h.b16 %v897
      %v969 = vunpack.c.l.b16 %v898
      %v970 = vunpack.c.h.b16 %v898
      %v971 = vpack.c.b16 %v923, %v923
      %v972 = vpack.c.b16 %v924, %v924
      %v973 = vpack.c.b16 %v925, %v925
      %v974 = vpack.c.b16 %v926, %v926
      %v975 = vpack.c.b16 %v927, %v927
      %v976 = vpack.c.b16 %v928, %v928
      %v977 = vpack.c.b16 %v929, %v929
      %v978 = vpack.c.b16 %v930, %v930
      %v979 = vpack.c.b16 %v931, %v931
      %v980 = vpack.c.b16 %v932, %v932
      %v981 = vpack.c.b16 %v933, %v933
      %v982 = vpack.c.b16 %v934, %v934
      %v983 = vpack.c.b16 %v935, %v935
      %v984 = vpack.c.b16 %v936, %v936
      %v985 = vpack.c.b16 %v937, %v937
      %v986 = vpack.c.b16 %v938, %v938
      %v987 = vpack.c.b16 %v939, %v939
      %v988 = vpack.c.b16 %v940, %v940
      %v989 = vpack.c.b16 %v941, %v941
      %v990 = vpack.c.b16 %v942, %v942
      %v991 = vpack.c.b16 %v943, %v943
      %v992 = vpack.c.b16 %v944, %v944
      %v993 = vpack.c.b16 %v945, %v945
      %v994 = vpack.c.b16 %v946, %v946
      %v995 = vpack.c.b16 %v947, %v947
      %v996 = vpack.c.b16 %v948, %v948
      %v997 = vpack.c.b16 %v949, %v949
      %v998 = vpack.c.b16 %v950, %v950
      %v999 = vpack.c.b16 %v951, %v951
      %v1000 = vpack.c.b16 %v952, %v952
      %v1001 = vpack.c.b16 %v953, %v953
      %v1002 = vpack.c.b16 %v954, %v954
      %v1003 = vpack.c.b16 %v955, %v955
      %v1004 = vpack.c.b16 %v956, %v956
      %v1005 = vpack.c.b16 %v957, %v957
      %v1006 = vpack.c.b16 %v958, %v958
      %v1007 = vpack.c.b16 %v959, %v959
      %v1008 = vpack.c.b16 %v960, %v960
      %v1009 = vpack.c.b16 %v961, %v961
      %v1010 = vpack.c.b16 %v962, %v962
      %v1011 = vpack.c.b16 %v963, %v963
      %v1012 = vpack.c.b16 %v964, %v964
      %v1013 = vpack.c.b16 %v965, %v965
      %v1014 = vpack.c.b16 %v966, %v966
      %v1015 = vpack.c.b16 %v967, %v967
      %v1016 = vpack.c.b16 %v968, %v968
      %v1017 = vpack.c.b16 %v969, %v969
      %v1018 = vpack.c.b16 %v970, %v970
      %1067 = vst [vmem:[#allocation8] sm:$0xf] %v971
      %1068 = vst [vmem:[#allocation8 + $0x4] sm:$0xf] %v972
      %1069 = vst [vmem:[#allocation8 + $0x8] sm:$0xf] %v973
      %1070 = vst [vmem:[#allocation8 + $0xc] sm:$0xf] %v974
      %1071 = vst [vmem:[#allocation8 + $0x10] sm:$0xf] %v975
      %1072 = vst [vmem:[#allocation8 + $0x14] sm:$0xf] %v976
      %1073 = vst [vmem:[#allocation8 + $0x18] sm:$0xf] %v977
      %1074 = vst [vmem:[#allocation8 + $0x1c] sm:$0xf] %v978
      %1075 = vst [vmem:[#allocation8 + $0x20] sm:$0xf] %v979
      %1076 = vst [vmem:[#allocation8 + $0x24] sm:$0xf] %v980
      %1077 = vst [vmem:[#allocation8 + $0x28] sm:$0xf] %v981
      %1078 = vst [vmem:[#allocation8 + $0x2c] sm:$0xf] %v982
      %1079 = vst [vmem:[#allocation8 + $0x30] sm:$0xf] %v983
      %1080 = vst [vmem:[#allocation8 + $0x34] sm:$0xf] %v984
      %1081 = vst [vmem:[#allocation8 + $0x38] sm:$0xf] %v985
      %1082 = vst [vmem:[#allocation8 + $0x3c] sm:$0xf] %v986
      %1083 = vst [vmem:[#allocation8 + $0x40] sm:$0xf] %v987
      %1084 = vst [vmem:[#allocation8 + $0x44] sm:$0xf] %v988
      %1085 = vst [vmem:[#allocation8 + $0x48] sm:$0xf] %v989
      %1086 = vst [vmem:[#allocation8 + $0x4c] sm:$0xf] %v990
      %1087 = vst [vmem:[#allocation8 + $0x50] sm:$0xf] %v991
      %1088 = vst [vmem:[#allocation8 + $0x54] sm:$0xf] %v992
      %1089 = vst [vmem:[#allocation8 + $0x58] sm:$0xf] %v993
      %1090 = vst [vmem:[#allocation8 + $0x5c] sm:$0xf] %v994
      %1091 = vst [vmem:[#allocation8 + $0x60] sm:$0xf] %v995
      %1092 = vst [vmem:[#allocation8 + $0x64] sm:$0xf] %v996
      %1093 = vst [vmem:[#allocation8 + $0x68] sm:$0xf] %v997
      %1094 = vst [vmem:[#allocation8 + $0x6c] sm:$0xf] %v998
      %1095 = vst [vmem:[#allocation8 + $0x70] sm:$0xf] %v999
      %1096 = vst [vmem:[#allocation8 + $0x74] sm:$0xf] %v1000
      %1097 = vst [vmem:[#allocation8 + $0x78] sm:$0xf] %v1001
      %1098 = vst [vmem:[#allocation8 + $0x7c] sm:$0xf] %v1002
      %1099 = vst [vmem:[#allocation8 + $0x80] sm:$0xf] %v1003
      %1100 = vst [vmem:[#allocation8 + $0x84] sm:$0xf] %v1004
      %1101 = vst [vmem:[#allocation8 + $0x88] sm:$0xf] %v1005
      %1102 = vst [vmem:[#allocation8 + $0x8c] sm:$0xf] %v1006
      %1103 = vst [vmem:[#allocation8 + $0x90] sm:$0xf] %v1007
      %1104 = vst [vmem:[#allocation8 + $0x94] sm:$0xf] %v1008
      %1105 = vst [vmem:[#allocation8 + $0x98] sm:$0xf] %v1009
      %1106 = vst [vmem:[#allocation8 + $0x9c] sm:$0xf] %v1010
      %1107 = vst [vmem:[#allocation8 + $0xa0] sm:$0xf] %v1011
      %1108 = vst [vmem:[#allocation8 + $0xa4] sm:$0xf] %v1012
      %1109 = vst [vmem:[#allocation8 + $0xa8] sm:$0xf] %v1013
      %1110 = vst [vmem:[#allocation8 + $0xac] sm:$0xf] %v1014
      %1111 = vst [vmem:[#allocation8 + $0xb0] sm:$0xf] %v1015
      %1112 = vst [vmem:[#allocation8 + $0xb4] sm:$0xf] %v1016
      %1113 = vst [vmem:[#allocation8 + $0xb8] sm:$0xf] %v1017
      %1114 = vst [vmem:[#allocation8 + $0xbc] sm:$0xf] %v1018
    $region29: #{tpu_custom_call.1} parent=1 // pred_fallthru
      _
    // Predicated region
    $region30: #{tpu_custom_call.1} parent=1 // pred_check
      _
    $region31: #{tpu_custom_call.1} parent=1 // pred_check_branch
      %1116 = sbr.rel (0) target = $region33
    $region32: #{tpu_custom_call.1} parent=1 // pred_region
      %s1118 = ssub.s32 3072, 3072
      %1119 = vsyncadd [#allocation5], %s1118
      %s1120 = sshll.u32 [#allocation8], 4
      %s1121 = int_to_ptr.vmem [resolvable:$true] %s1120
      %1126 = dma.vmem_to_hbm [thread:$0]  %s1121, 3072, %s3, [#allocation5], 64, 64, 4
    $region33: #{tpu_custom_call.1} parent=1 // pred_fallthru
      _
    // Predicated region
    $region34: #{tpu_custom_call.1} parent=1 // pred_check
      _
    $region35: #{tpu_custom_call.1} parent=1 // pred_check_branch
      %1128 = sbr.rel (0) target = $region37
    $region36: #{tpu_custom_call.1} parent=1 // pred_region
      %1129 = dma.done [#allocation5], 3072
    $region37: #{tpu_custom_call.1} parent=1 // pred_fallthru
      _
    %1130 = vsyncpa [#allocation4], 1
    %1131 = vsyncpa [#allocation7], 1
    %1132 = vsyncpa [#allocation5], 1

</llo_original>
